<compile_context>
chip_gen: v5e
topology: v5e:2x2
jax: 0.10.0
libtpu: 0.0.40
codegen_flags: <defaults>
</compile_context>

<pallas_src>
import jax
import jax.numpy as jnp
from jax.experimental import pallas as pl
from jax.experimental.pallas import tpu as pltpu


def _round_up(n, m):
    return ((n + m - 1) // m) * m


def fnn_kernel(x_ref, w1_ref, b1_ref, w2_ref, b2_ref, w3_ref, b3_ref, o_ref):
    # x: (TILE_N, D_in)  w1: (D_in, H)  w2: (H, H2)  w3: (1, H2)  b3: (1, 1)
    x = x_ref[...]

    h = jnp.dot(x, w1_ref[...], preferred_element_type=jnp.float32) + b1_ref[...]
    a1 = jax.nn.sigmoid(h)

    o1 = jnp.dot(a1, w2_ref[...], preferred_element_type=jnp.float32) + b2_ref[...]
    a2 = jax.nn.sigmoid(o1)

    # Final scalar head as a VPU multiply + lane reduction instead of a
    # 1-column MXU matmul.
    o2 = jnp.sum(a2 * w3_ref[...], axis=-1, keepdims=True) + b3_ref[0, 0]
    o_ref[...] = o2.astype(o_ref.dtype)


def fnn_forward(x, params, *, tile_n=1024):
    """x: (B, S, D_in) -> (B,)  (scalar head at the last sequence position)."""
    w1, b1, w2, b2, w3, b3 = params
    B, S, D_in = x.shape
    H = w1.shape[1]
    H2 = w2.shape[1]

    # Only the last sequence position reaches the output -> slice it up front.
    x_last = x[:, -1, :]                                  # (B, D_in)

    # Row tiling: large tiles for pipelining, but never bigger than needed.
    tile_n = min(tile_n, _round_up(B, 8))
    n_pad = _round_up(B, tile_n)
    if n_pad != B:
        x_last = jnp.pad(x_last, ((0, n_pad - B), (0, 0)))

    w3_row = w3.reshape(1, H2)                            # (1, H2) for broadcast

    grid = (n_pad // tile_n,)

    resident = lambda shape: pl.BlockSpec(shape, lambda i: (0, 0))

    out2d = pl.pallas_call(
        fnn_kernel,
        out_shape=jax.ShapeDtypeStruct((n_pad, 1), jnp.float32),
        grid=grid,
        in_specs=[
            pl.BlockSpec((tile_n, D_in), lambda i: (i, 0)),   # x tile streams
            resident((D_in, H)), resident((1, H)),            # weights stay put
            resident((H, H2)), resident((1, H2)),
            resident((1, H2)), resident((1, 1)),
        ],
        out_specs=pl.BlockSpec((tile_n, 1), lambda i: (i, 0)),
        compiler_params=pltpu.CompilerParams(
            dimension_semantics=("parallel",)),               # megacore on v7x
    )(x_last, w1, b1, w2, b2, w3_row, b3)

    return out2d[:B, 0]


def init_params(key, input_size, hidden_size):
    """Deterministic init matching the nn.Linear shapes (stored transposed)."""
    h2 = hidden_size // 2
    ks = jax.random.split(key, 6)

    def lin(kw, kb, fan_in, fan_out):
        bound = 1.0 / jnp.sqrt(fan_in)
        w = jax.random.uniform(kw, (fan_in, fan_out), jnp.float32, -bound, bound)
        b = jax.random.uniform(kb, (1, fan_out), jnp.float32, -bound, bound)
        return w, b

    w1, b1 = lin(ks[0], ks[1], input_size, hidden_size)
    w2, b2 = lin(ks[2], ks[3], hidden_size, h2)
    w3, b3 = lin(ks[4], ks[5], h2, 1)
    return (w1, b1, w2, b2, w3, b3)


if __name__ == "__main__":
    key = jax.random.PRNGKey(0)
    k_x, k_p = jax.random.split(key)

    B, S, D_IN, HID = 2, 8, 16, 32
    x = jax.random.normal(k_x, (B, S, D_IN), jnp.float32)
    params = init_params(k_p, D_IN, HID)

    out = fnn_forward(x, params)
    jax.block_until_ready(out)

    # Reference check in plain JAX (full PyTorch-equivalent path).
    w1, b1, w2, b2, w3, b3 = params
    h = jax.nn.sigmoid(x.reshape(-1, D_IN) @ w1 + b1)
    a = jax.nn.sigmoid(h @ w2 + b2)
    ref = (a @ w3 + b3).reshape(-1, S)[:, -1]

    assert out.shape == (B,)
    assert jnp.allclose(out, ref, atol=1e-5, rtol=1e-5)

    print("KERNEL_OK")
</pallas_src>

<mosaic_0001>
module attributes {stable_mosaic.version = 11 : i64} {
  func.func @fnn_kernel(%arg0: i32, %arg1: memref<8x16xf32, #tpu.memory_space<vmem>>, %arg2: memref<16x32xf32, #tpu.memory_space<vmem>>, %arg3: memref<1x32xf32, #tpu.memory_space<vmem>>, %arg4: memref<32x16xf32, #tpu.memory_space<vmem>>, %arg5: memref<1x16xf32, #tpu.memory_space<vmem>>, %arg6: memref<1x16xf32, #tpu.memory_space<vmem>>, %arg7: memref<1x1xf32, #tpu.memory_space<vmem>>, %arg8: memref<8x1xf32, #tpu.memory_space<vmem>>) attributes {dimension_semantics = [#tpu.dimension_semantics<parallel>], iteration_bounds = array<i64: 1>, scalar_prefetch = 0 : i64, scratch_operands = 0 : i64, tpu.core_type = #tpu.core_type<tc>, window_params = [{transform_indices = @transform_0, window_bounds = array<i64: 8, 16>}, {pipeline_mode = #tpu.pipeline_mode<synchronous>, transform_indices = @transform_1, window_bounds = array<i64: 16, 32>}, {pipeline_mode = #tpu.pipeline_mode<synchronous>, transform_indices = @transform_2, window_bounds = array<i64: 1, 32>}, {pipeline_mode = #tpu.pipeline_mode<synchronous>, transform_indices = @transform_3, window_bounds = array<i64: 32, 16>}, {pipeline_mode = #tpu.pipeline_mode<synchronous>, transform_indices = @transform_4, window_bounds = array<i64: 1, 16>}, {pipeline_mode = #tpu.pipeline_mode<synchronous>, transform_indices = @transform_5, window_bounds = array<i64: 1, 16>}, {pipeline_mode = #tpu.pipeline_mode<synchronous>, transform_indices = @transform_6, window_bounds = array<i64: 1, 1>}, {transform_indices = @transform_7, window_bounds = array<i64: 8, 1>}]} {
    %c0 = arith.constant 0 : index
    %c0_0 = arith.constant 0 : index
    %0 = vector.load %arg1[%c0, %c0_0] : memref<8x16xf32, #tpu.memory_space<vmem>>, vector<8x16xf32>
    %c0_1 = arith.constant 0 : index
    %c0_2 = arith.constant 0 : index
    %1 = vector.load %arg2[%c0_1, %c0_2] : memref<16x32xf32, #tpu.memory_space<vmem>>, vector<16x32xf32>
    %cst = arith.constant dense<0.000000e+00> : vector<8x32xf32>
    %2 = tpu.matmul %0, %1, %cst {dimension_numbers = #tpu.dot_dimension_numbers<[1], [0], [0], [1], [0, 0, 1, 1], [], []>} : vector<8x16xf32>, vector<16x32xf32>, vector<8x32xf32> -> vector<8x32xf32>
    %c0_3 = arith.constant 0 : index
    %c0_4 = arith.constant 0 : index
    %3 = vector.load %arg3[%c0_3, %c0_4] : memref<1x32xf32, #tpu.memory_space<vmem>>, vector<1x32xf32>
    %4 = vector.broadcast %3 : vector<1x32xf32> to vector<8x32xf32>
    %5 = arith.addf %2, %4 : vector<8x32xf32>
    %6 = arith.negf %5 : vector<8x32xf32>
    %7 = math.exp %6 : vector<8x32xf32>
    %cst_5 = arith.constant 1.000000e+00 : f32
    %8 = vector.broadcast %cst_5 : f32 to vector<8x32xf32>
    %9 = arith.addf %8, %7 : vector<8x32xf32>
    %10 = arith.divf %8, %9 : vector<8x32xf32>
    %c0_6 = arith.constant 0 : index
    %c0_7 = arith.constant 0 : index
    %11 = vector.load %arg4[%c0_6, %c0_7] : memref<32x16xf32, #tpu.memory_space<vmem>>, vector<32x16xf32>
    %cst_8 = arith.constant dense<0.000000e+00> : vector<8x16xf32>
    %12 = tpu.matmul %10, %11, %cst_8 {dimension_numbers = #tpu.dot_dimension_numbers<[1], [0], [0], [1], [0, 0, 1, 1], [], []>} : vector<8x32xf32>, vector<32x16xf32>, vector<8x16xf32> -> vector<8x16xf32>
    %c0_9 = arith.constant 0 : index
    %c0_10 = arith.constant 0 : index
    %13 = vector.load %arg5[%c0_9, %c0_10] : memref<1x16xf32, #tpu.memory_space<vmem>>, vector<1x16xf32>
    %14 = vector.broadcast %13 : vector<1x16xf32> to vector<8x16xf32>
    %15 = arith.addf %12, %14 : vector<8x16xf32>
    %16 = arith.negf %15 : vector<8x16xf32>
    %17 = math.exp %16 : vector<8x16xf32>
    %cst_11 = arith.constant 1.000000e+00 : f32
    %18 = vector.broadcast %cst_11 : f32 to vector<8x16xf32>
    %19 = arith.addf %18, %17 : vector<8x16xf32>
    %20 = arith.divf %18, %19 : vector<8x16xf32>
    %c0_12 = arith.constant 0 : index
    %c0_13 = arith.constant 0 : index
    %21 = vector.load %arg6[%c0_12, %c0_13] : memref<1x16xf32, #tpu.memory_space<vmem>>, vector<1x16xf32>
    %22 = vector.broadcast %21 : vector<1x16xf32> to vector<8x16xf32>
    %23 = arith.mulf %20, %22 : vector<8x16xf32>
    %cst_14 = arith.constant dense<0.000000e+00> : vector<8xf32>
    %24 = vector.multi_reduction <add>, %23, %cst_14 [1] : vector<8x16xf32> to vector<8xf32>
    %25 = vector.shape_cast %24 : vector<8xf32> to vector<8x1xf32>
    %c0_15 = arith.constant 0 : index
    %c0_16 = arith.constant 0 : index
    %26 = vector.load %arg7[%c0_15, %c0_16] : memref<1x1xf32, #tpu.memory_space<vmem>>, vector<1x1xf32>
    %27 = vector.extract %26[0, 0] : f32 from vector<1x1xf32>
    %28 = vector.broadcast %27 : f32 to vector<8x1xf32>
    %29 = arith.addf %25, %28 : vector<8x1xf32>
    %c0_17 = arith.constant 0 : index
    %c0_18 = arith.constant 0 : index
    %30 = vector.load %arg8[%c0_17, %c0_18] : memref<8x1xf32, #tpu.memory_space<vmem>>, vector<8x1xf32>
    tpu.vector_store %arg8[%c0_17, %c0_18], %29 {strides = array<i32>} : memref<8x1xf32, #tpu.memory_space<vmem>>, vector<8x1xf32>,
    return
  }
  func.func @transform_0(%arg0: i32) -> (i32, i32) {
    %c0_i32 = arith.constant 0 : i32
    %c0_i32_0 = arith.constant 0 : i32
    return %arg0, %c0_i32 : i32, i32
  }
  func.func @transform_1(%arg0: i32) -> (i32, i32) {
    %c0_i32 = arith.constant 0 : i32
    %c0_i32_0 = arith.constant 0 : i32
    %c0_i32_1 = arith.constant 0 : i32
    return %c0_i32, %c0_i32_0 : i32, i32
  }
  func.func @transform_2(%arg0: i32) -> (i32, i32) {
    %c0_i32 = arith.constant 0 : i32
    %c0_i32_0 = arith.constant 0 : i32
    %c0_i32_1 = arith.constant 0 : i32
    return %c0_i32, %c0_i32_0 : i32, i32
  }
  func.func @transform_3(%arg0: i32) -> (i32, i32) {
    %c0_i32 = arith.constant 0 : i32
    %c0_i32_0 = arith.constant 0 : i32
    %c0_i32_1 = arith.constant 0 : i32
    return %c0_i32, %c0_i32_0 : i32, i32
  }
  func.func @transform_4(%arg0: i32) -> (i32, i32) {
    %c0_i32 = arith.constant 0 : i32
    %c0_i32_0 = arith.constant 0 : i32
    %c0_i32_1 = arith.constant 0 : i32
    return %c0_i32, %c0_i32_0 : i32, i32
  }
  func.func @transform_5(%arg0: i32) -> (i32, i32) {
    %c0_i32 = arith.constant 0 : i32
    %c0_i32_0 = arith.constant 0 : i32
    %c0_i32_1 = arith.constant 0 : i32
    return %c0_i32, %c0_i32_0 : i32, i32
  }
  func.func @transform_6(%arg0: i32) -> (i32, i32) {
    %c0_i32 = arith.constant 0 : i32
    %c0_i32_0 = arith.constant 0 : i32
    %c0_i32_1 = arith.constant 0 : i32
    return %c0_i32, %c0_i32_0 : i32, i32
  }
  func.func @transform_7(%arg0: i32) -> (i32, i32) {
    %c0_i32 = arith.constant 0 : i32
    %c0_i32_0 = arith.constant 0 : i32
    return %arg0, %c0_i32 : i32, i32
  }
}

</mosaic_0001>

<llo_original>
// kernel: tpu_custom_call.1
$region0: #{tpu_custom_call.1}
  #allocation0 [shape = 'u32[]', space=smem, size = 0x4, offset = 0x4, fixed_abs, tag = 'smem constant byte address 0x4 - core index']
  #allocation1 [shape = 'u32[72,128]{1,0:T(1,128)}', space=vmem, size = 0x9000, scoped, tag = 'internal scratch']
  #allocation2 [shape = 'f32[1,1]{1,0:T(1,128)S(1)}', space=vmem, size = 0x200, scoped, tag = 'scoped memory for tpu_custom_call.1']
  %s0 = inlined_call_operand.vmem [shape: f32[8,16], index: 0, kind: input, shape index: {}]
  %s1 = inlined_call_operand.vmem [shape: f32[16,32], index: 1, kind: input, shape index: {}]
  %s2 = inlined_call_operand.vmem [shape: f32[1,32], index: 2, kind: input, shape index: {}]
  %s3 = inlined_call_operand.vmem [shape: f32[32,16], index: 3, kind: input, shape index: {}]
  %s4 = inlined_call_operand.vmem [shape: f32[1,16], index: 4, kind: input, shape index: {}]
  %s5 = inlined_call_operand.vmem [shape: f32[1,16], index: 5, kind: input, shape index: {}]
  %s6 = inlined_call_operand.<no memory space> [shape: f32[1,1], index: 6, kind: input, shape index: {}]
  %s7 = inlined_call_operand.vmem [shape: f32[8,1], index: 7, kind: output, shape index: {}]
  %s8 = sld [smem:[#allocation0]]
  $region38: #{tpu_custom_call.1} parent=0
    _
  %s10 = ssub.s32 1, %s8
  %s11 = scalar_select 0, %s10, %s8
  %v12 = vstv %s6
  %13 = vst [vmem:[#allocation2] sm:$0x1] %v12
  // Predicated region
  $region2: #{tpu_custom_call.1} parent=0 // pred_check
    _
  $region3: #{tpu_custom_call.1} parent=0 // pred_check_branch
    %15 = sbr.rel (0) target = $region5
  $region4: #{tpu_custom_call.1} parent=0 // pred_region
    _
  $region5: #{tpu_custom_call.1} parent=0 // pred_fallthru
    _
  // Predicated region
  $region6: #{tpu_custom_call.1} parent=0 // pred_check
    _
  $region7: #{tpu_custom_call.1} parent=0 // pred_check_branch
    %17 = sbr.rel (0) target = $region9
  $region8: #{tpu_custom_call.1} parent=0 // pred_region
    _
  $region9: #{tpu_custom_call.1} parent=0 // pred_fallthru
    _
  // Predicated region
  $region10: #{tpu_custom_call.1} parent=0 // pred_check
    _
  $region11: #{tpu_custom_call.1} parent=0 // pred_check_branch
    %19 = sbr.rel (0) target = $region13
  $region12: #{tpu_custom_call.1} parent=0 // pred_region
    _
  $region13: #{tpu_custom_call.1} parent=0 // pred_fallthru
    _
  // Predicated region
  $region14: #{tpu_custom_call.1} parent=0 // pred_check
    _
  $region15: #{tpu_custom_call.1} parent=0 // pred_check_branch
    %21 = sbr.rel (0) target = $region17
  $region16: #{tpu_custom_call.1} parent=0 // pred_region
    _
  $region17: #{tpu_custom_call.1} parent=0 // pred_fallthru
    _
  // Predicated region
  $region18: #{tpu_custom_call.1} parent=0 // pred_check
    _
  $region19: #{tpu_custom_call.1} parent=0 // pred_check_branch
    %23 = sbr.rel (0) target = $region21
  $region20: #{tpu_custom_call.1} parent=0 // pred_region
    _
  $region21: #{tpu_custom_call.1} parent=0 // pred_fallthru
    _
  // Predicated region
  $region22: #{tpu_custom_call.1} parent=0 // pred_check
    _
  $region23: #{tpu_custom_call.1} parent=0 // pred_check_branch
    %25 = sbr.rel (0) target = $region25
  $region24: #{tpu_custom_call.1} parent=0 // pred_region
    _
  $region25: #{tpu_custom_call.1} parent=0 // pred_fallthru
    _
  // Predicated region
  $region26: #{tpu_custom_call.1} parent=0 // pred_check
    _
  $region27: #{tpu_custom_call.1} parent=0 // pred_check_branch
    %27 = sbr.rel (0) target = $region29
  $region28: #{tpu_custom_call.1} parent=0 // pred_region
    _
  $region29: #{tpu_custom_call.1} parent=0 // pred_fallthru
    _
  %v28 = vld [vmem:[%s0] sm:$0xff]
  %v29 = vld [vmem:[%s1] sm:$0xff]
  %v30 = vld [vmem:[%s1 + $0x8] sm:$0xff]
  %v31 = vld [vmem:[%s2] sm:$0x1]
  %v33 = vperm.slane %v31, 0
  %vm35 = vcmask 130048
  %v37 = vsel %vm35, %v28, 0
  %39 = vmatpush.msra.mxu0 0.0
  %40 = vmatpush.msra.mxu0 0.0
  %41 = vmatpush.msra.mxu0 0.0
  %42 = vmatpush.msra.mxu0 0.0
  %43 = vmatpush.msra.mxu0 0.0
  %44 = vmatpush.msra.mxu0 0.0
  %45 = vmatpush.msra.mxu0 0.0
  %46 = vmatpush.msra.mxu0 0.0
  %47 = vmatpush.msra.mxu0 0.0
  %48 = vmatpush.msra.mxu0 0.0
  %49 = vmatpush.msra.mxu0 0.0
  %50 = vmatpush.msra.mxu0 0.0
  %51 = vmatpush.msra.mxu0 0.0
  %52 = vmatpush.msra.mxu0 0.0
  %53 = vmatpush.msra.mxu0 %v30
  %54 = vmatpush.msra.mxu0 %v29
  %55 = vmatmul.f32.gmra.mxu0 %v37
  %v56 = vpop.f32.mrf.mxu0
  %v57 = vadd.f32 %v33, %v56
  %58 = vdwg.mxu0
  %v59 = vxor.u32 %v57, 2147483648
  %v60 = vmul.f32 %v59, 1.442695
  %v61 = vpow.pop %v60
  %v62 = vadd.f32 %v61, 1.0
  %v63 = vrcp.pop %v62
  %v64 = vmul.f32 %v62, %v63
  %v65 = vsub.f32 1.0, %v64
  %v66 = vmul.f32 %v63, %v65
  %v67 = vadd.f32 %v63, %v66
  %vm68 = vweird.f32 %v62
  %vm69 = vweird.f32 %v63
  %vm70 = vmor %vm68, %vm69
  %v71 = vsel %vm70, %v63, %v67
  %v72 = vand.u32 2147483647, %v62
  %vm73 = vcmp.eq.f32.partialorder %v72, 8.507059e+37
  %v74 = vand.u32 %v62, 2147483648
  %v75 = vor.u32 1.1754944e-38, %v74
  %v76 = vsel %vm73, %v75, %v71
  %v77 = vmul.f32 1.0, %v76
  %v78 = vld [vmem:[%s3] sm:$0xff]
  %v79 = vld [vmem:[%s3 + $0x8] sm:$0xff]
  %v80 = vld [vmem:[%s3 + $0x10] sm:$0xff]
  %v81 = vld [vmem:[%s3 + $0x18] sm:$0xff]
  %v82 = vld [vmem:[%s4] sm:$0x1]
  %v84 = vperm.slane %v82, 0
  %vm86 = vcmask 261120
  %v88 = vsel %vm86, %v77, 0
  %90 = vmatpush.msra.mxu0 0.0
  %91 = vmatpush.msra.mxu0 0.0
  %92 = vmatpush.msra.mxu0 0.0
  %93 = vmatpush.msra.mxu0 0.0
  %94 = vmatpush.msra.mxu0 0.0
  %95 = vmatpush.msra.mxu0 0.0
  %96 = vmatpush.msra.mxu0 0.0
  %97 = vmatpush.msra.mxu0 0.0
  %98 = vmatpush.msra.mxu0 0.0
  %99 = vmatpush.msra.mxu0 0.0
  %100 = vmatpush.msra.mxu0 0.0
  %101 = vmatpush.msra.mxu0 0.0
  %102 = vmatpush.msra.mxu0 %v81
  %103 = vmatpush.msra.mxu0 %v80
  %104 = vmatpush.msra.mxu0 %v79
  %105 = vmatpush.msra.mxu0 %v78
  %106 = vmatmul.f32.gmra.mxu0 %v88
  %v107 = vpop.f32.mrf.mxu0
  %v108 = vadd.f32 %v84, %v107
  %109 = vdwg.mxu0
  %v110 = vxor.u32 %v108, 2147483648
  %v111 = vmul.f32 %v110, 1.442695
  %v112 = vpow.pop %v111
  %v113 = vadd.f32 %v112, 1.0
  %v114 = vrcp.pop %v113
  %v115 = vmul.f32 %v113, %v114
  %v116 = vsub.f32 1.0, %v115
  %v117 = vmul.f32 %v114, %v116
  %v118 = vadd.f32 %v114, %v117
  %vm119 = vweird.f32 %v113
  %vm120 = vweird.f32 %v114
  %vm121 = vmor %vm119, %vm120
  %v122 = vsel %vm121, %v114, %v118
  %v123 = vand.u32 2147483647, %v113
  %vm124 = vcmp.eq.f32.partialorder %v123, 8.507059e+37
  %v125 = vand.u32 %v113, 2147483648
  %v126 = vor.u32 1.1754944e-38, %v125
  %v127 = vsel %vm124, %v126, %v122
  %v128 = vmul.f32 1.0, %v127
  %v129 = vld [vmem:[%s5] sm:$0x1]
  %v131 = vperm.slane %v129, 0
  %v133 = vmul.f32 %v128, %v131
  %v134 = vsel %vm35, %v133, 0.0
  %135 = vadd.xlane.f32.xlu0 %v134
  %v136 = vpop.xlane.xlu0 %135
  %v137 = vld [vmem:[#allocation2] sm:$0x1]
  %s138 = vtos %v137
  %v139 = vstv %s138
  %v140 = vadd.f32 %v136, %v139
  %vm141 = vcmask 7168
  %142 = vst.msk [vmem:[%s7] sm:$0xff] %vm141, %v140
  // Predicated region
  $region30: #{tpu_custom_call.1} parent=0 // pred_check
    _
  $region31: #{tpu_custom_call.1} parent=0 // pred_check_branch
    %144 = sbr.rel (0) target = $region33
  $region32: #{tpu_custom_call.1} parent=0 // pred_region
    _
  $region33: #{tpu_custom_call.1} parent=0 // pred_fallthru
    _
  // Predicated region
  $region34: #{tpu_custom_call.1} parent=0 // pred_check
    _
  $region35: #{tpu_custom_call.1} parent=0 // pred_check_branch
    %146 = sbr.rel (0) target = $region37
  $region36: #{tpu_custom_call.1} parent=0 // pred_region
    _
  $region37: #{tpu_custom_call.1} parent=0 // pred_fallthru
    _

</llo_original>
